<compile_context>
chip_gen: v5e
topology: v5e:2x2
jax: 0.10.0
libtpu: 0.0.40
codegen_flags: <defaults>
</compile_context>

<pallas_src>
import functools

import jax
import jax.numpy as jnp
import numpy as np
from jax.experimental import pallas as pl
from jax.experimental.pallas import tpu as pltpu

EPS = 1e-5  # nn.LayerNorm default eps


def _upsample_kernel(x_ref, xn_ref, wp_ref, bp_ref, g_ref, be_ref,
                     wmain_ref, wt0_ref, bt_ref, o_ref, *, seq_len, padded, phases):
    """One (batch, row-tile) block per grid step.

    x_ref    : (1, TL, D)    input rows of this tile (native dtype; cast in-kernel)
    xn_ref   : (1, 1, 1, D)  halo row = first row of the NEXT tile (zeros on the last tile)
    wp_ref   : (D, D)        pointwise-conv weight, (Din, Dout), compute dtype
    bp_ref   : (1, D)        pointwise-conv bias (f32)
    g_ref    : (1, D)        layernorm gamma (f32)
    be_ref   : (1, D)        layernorm beta (f32)
    wmain_ref: (D, S*D)      [Wt[1] | ... | Wt[S]], compute dtype
    wt0_ref  : (D, D)        Wt[0] (narrow tail weight), compute dtype
    bt_ref   : (1, S*D)      conv-transpose bias tiled per phase (f32)
    o_ref    : (1, TL, S*D)  output; o[0, l, s*D + d] == final[l*S + s, d]
    """
    TL = x_ref.shape[1]
    D = x_ref.shape[2]
    S = phases
    cd = wp_ref.dtype  # compute dtype for MXU operands

    x = x_ref[0].astype(cd)        # (TL, D)  in-kernel cast (hides under DMA/MXU pipeline)
    xh = xn_ref[0, 0].astype(cd)   # (1, D)   halo row

    # --- proj: Conv1d(kernel_size=1) == channel matmul (tile rows + the single halo row) ---
    wp = wp_ref[...]
    bp = bp_ref[...]
    h = jnp.dot(x, wp, preferred_element_type=jnp.float32) + bp     # (TL, D) f32
    hh = jnp.dot(xh, wp, preferred_element_type=jnp.float32) + bp   # (1, D)  f32

    # --- LayerNorm over d_model (lane reduction), f32 ---
    g = g_ref[...]
    be = be_ref[...]

    def _ln(v):
        mu = jnp.mean(v, axis=-1, keepdims=True)
        var = jnp.mean((v - mu) ** 2, axis=-1, keepdims=True)
        return (v - mu) * jax.lax.rsqrt(var + EPS) * g + be

    hn = _ln(h)        # (TL, D)
    hnh = _ln(hh)      # (1, D)

    # The halo row must act as all-zero for the last tile of the sequence (hn[L] does not exist).
    valid_halo = (pl.program_id(1) + 1 < pl.num_programs(1)).astype(jnp.float32)
    hnh = hnh * valid_halo

    rows = jax.lax.broadcasted_iota(jnp.int32, (TL, 1), 0)          # (TL, 1)

    # Zero out rows past the true sequence length (only when the last tile was padded), so that
    # hn_shift[l] = hn[l+1] is exactly zero for l == L-1 sitting mid-tile.
    if padded:
        row_g = pl.program_id(1) * TL + rows
        hn = hn * (row_g < seq_len).astype(jnp.float32)

    # hn_shift[l] = hn[l+1]; last row comes from the halo.  XLU sublane roll (== jnp.roll(hn, -1, 0))
    # keeps this off the scarce vector-store slot; single-row fixup via jnp.where.
    hn_shift = pltpu.roll(hn, shift=TL - 1, axis=0)
    hn_shift = jnp.where(rows == TL - 1, hnh, hn_shift)             # (TL, D)

    # --- ConvTranspose1d (stride=S, padding=1, output_padding=1, K=S+1) ---
    #   out[l, s*D + d] = hn[l] @ Wt[s+1]  (+ hn[l+1] @ Wt[0]  when s == S-1)
    out = jnp.dot(hn.astype(cd), wmain_ref[...], preferred_element_type=jnp.float32)   # (TL, S*D)
    tail = jnp.dot(hn_shift.astype(cd), wt0_ref[...], preferred_element_type=jnp.float32)  # (TL, D)
    if S > 1:
        # Lane-slice add at a multiple of 128 (when D % 128 == 0) -> stays unmasked.
        out = jnp.concatenate([out[:, :(S - 1) * D], out[:, (S - 1) * D:] + tail], axis=1)
    else:
        out = out + tail
    out = out + bt_ref[...]

    # ELU (alpha=1), numerically-safe exp branch, f32.
    out = jnp.where(out > 0.0, out, jnp.exp(jnp.minimum(out, 0.0)) - 1.0)

    # Single lane-dense store of the whole tile.
    o_ref[0] = out.astype(o_ref.dtype)


def _choose_row_tile(L, B, target=256):
    """Fixed row tile (multiple of 8, capped) for a cdiv grid; keep >=2 grid slices when B == 1."""
    tl = min(target, L)
    if tl >= 8:
        tl -= tl % 8
    # v7x has two TensorCores; make sure the (B, T) parallel grid has at least 2 slices.
    if B == 1 and tl >= 16 and (L + tl - 1) // tl < 2:
        tl = max(8, (tl // 2) - ((tl // 2) % 8))
    return max(tl, 1)


def upsample_layer(x, params, *, down_sample_scale, padding=1, output_padding=1,
                   compute_dtype=jnp.bfloat16, out_dtype=None, row_tile=None):
    """x: (B, L, D) -> (B, down_sample_scale * L, D).  Matches UpSampleLayer.forward.

    compute_dtype: dtype of the MXU operands (x cast in-kernel, weights cast once in the wrapper);
                   accumulation, LayerNorm and ELU are always f32.
    out_dtype:     output dtype (defaults to x.dtype).
    """
    assert padding == 1 and output_padding == 1, (
        "kernel specializes the module defaults padding=1, output_padding=1 (K = S + 1)")
    B, L, D = x.shape
    S = down_sample_scale
    cd = compute_dtype
    od = x.dtype if out_dtype is None else out_dtype
    # NOTE: best performance (unmasked lane-dense stores, full MXU lanes) needs D % 128 == 0;
    # other D still produce correct results, just with masked stores.

    TL = _choose_row_tile(L, B) if row_tile is None else row_tile
    T = (L + TL - 1) // TL
    L_pad = T * TL
    padded = L_pad != L
    x_p = jnp.pad(x, ((0, 0), (0, L_pad - L), (0, 0))) if padded else x

    # ---- plain-JAX glue: re-layout the PyTorch-convention weights (done once, tiny) ----
    wp_t = params["proj_w"].reshape(D, D).T.astype(cd)        # Conv1d (Dout, Din, 1) -> (Din, Dout)
    bp = params["proj_b"].reshape(1, D).astype(jnp.float32)
    g = params["ln_g"].reshape(1, D).astype(jnp.float32)
    be = params["ln_b"].reshape(1, D).astype(jnp.float32)

    wt = jnp.transpose(params["up_w"], (2, 0, 1))             # ConvT1d (Din, Dout, K) -> (K, Din, Dout)
    w_main = jnp.concatenate([wt[k] for k in range(1, S + 1)], axis=1).astype(cd)   # (D, S*D)
    wt0 = wt[0].astype(cd)                                                          # (D, D) narrow tail
    bt = jnp.tile(params["up_b"].reshape(1, D), (1, S)).astype(jnp.float32)         # (1, S*D)

    # Halo rows: x_next[b, t] = x_p[b, (t+1)*TL] (first row of the NEXT tile); last tile gets zeros
    # (and is masked inside the kernel anyway).  Passed in native dtype, cast in-kernel.
    if T > 1:
        nxt = jnp.concatenate([x_p[:, TL::TL, :], jnp.zeros((B, 1, D), x.dtype)], axis=1)  # (B, T, D)
    else:
        nxt = jnp.zeros((B, 1, D), x.dtype)
    x_next = nxt.reshape(B, T, 1, D)

    kern = functools.partial(_upsample_kernel, seq_len=L, padded=padded, phases=S)

    itemsize_cd = jnp.dtype(cd).itemsize
    flops = 2 * B * L_pad * D * D            # proj
    flops += 2 * B * L_pad * D * (S * D)     # main transposed-conv taps
    flops += 2 * B * L_pad * D * D           # narrow tail tap
    bytes_accessed = (x_p.size * x_p.dtype.itemsize
                      + B * L_pad * S * D * jnp.dtype(od).itemsize
                      + (wp_t.size + w_main.size + wt0.size) * itemsize_cd)
    cost = pl.CostEstimate(flops=int(flops),
                           transcendentals=int(B * L_pad * (S * D + 2)),
                           bytes_accessed=int(bytes_accessed))

    # VMEM budget (per buffer, double-buffered by the pipeline): x tile + out tile + constants.
    # At D=512, S=4, TL=256, bf16 weights this stays well inside v5e's 16 MiB default scoped limit
    # and v7x's 64 MiB physical VMEM, so no vmem_limit_bytes override is needed.
    out3 = pl.pallas_call(
        kern,
        out_shape=jax.ShapeDtypeStruct((B, L_pad, S * D), od),
        grid=(B, T),
        in_specs=[
            pl.BlockSpec((1, TL, D), lambda b, t: (b, t, 0)),        # x rows of this tile
            pl.BlockSpec((1, 1, 1, D), lambda b, t: (b, t, 0, 0)),   # halo row
            pl.BlockSpec((D, D), lambda b, t: (0, 0)),               # wp_t   (constant -> DMA'd once)
            pl.BlockSpec((1, D), lambda b, t: (0, 0)),               # bp
            pl.BlockSpec((1, D), lambda b, t: (0, 0)),               # gamma
            pl.BlockSpec((1, D), lambda b, t: (0, 0)),               # beta
            pl.BlockSpec((D, S * D), lambda b, t: (0, 0)),           # w_main = [Wt1 | ... | WtS]
            pl.BlockSpec((D, D), lambda b, t: (0, 0)),               # wt0 (narrow tail)
            pl.BlockSpec((1, S * D), lambda b, t: (0, 0)),           # bias tiled per phase
        ],
        out_specs=pl.BlockSpec((1, TL, S * D), lambda b, t: (b, t, 0)),
        compiler_params=pltpu.CompilerParams(
            dimension_semantics=("parallel", "parallel")),
        cost_estimate=cost,
    )(x_p, x_next, wp_t, bp, g, be, w_main, wt0, bt)

    if padded:
        out3 = out3[:, :L, :]
    # Free row-major reshape: out3[b, l, s*D + d] == final[b, l*S + s, d].
    return out3.reshape(B, S * L, D)


def upsample_ref(x, params, *, down_sample_scale, padding=1, output_padding=1):
    """Pure-JAX reference mirroring the PyTorch forward exactly (scatter-add conv transpose)."""
    B, L, D = x.shape
    S = down_sample_scale
    K = S + 2 * padding - output_padding
    wp_t = params["proj_w"].reshape(D, D).T
    h = x @ wp_t + params["proj_b"]
    mu = h.mean(-1, keepdims=True)
    var = ((h - mu) ** 2).mean(-1, keepdims=True)
    hn = (h - mu) / jnp.sqrt(var + EPS) * params["ln_g"] + params["ln_b"]
    wt = jnp.transpose(params["up_w"], (2, 0, 1))   # (K, Din, Dout)
    full = jnp.zeros((B, (L - 1) * S + K, D), jnp.float32)
    for k in range(K):
        full = full.at[:, jnp.arange(L) * S + k, :].add(hn @ wt[k])
    out = full[:, padding:padding + L * S, :] + params["up_b"]
    return jnp.where(out > 0, out, jnp.exp(out) - 1.0)


if __name__ == "__main__":
    B, L, D = 2, 8, 128   # D multiple of 128 -> lane-dense, unmasked stores
    S = 2                 # down_sample_scale
    K = S + 1             # ConvTranspose1d kernel size

    key = jax.random.PRNGKey(0)
    ks = jax.random.split(key, 8)
    params = {
        "proj_w": 0.1 * jax.random.normal(ks[0], (D, D, 1), jnp.float32),   # Conv1d weight
        "proj_b": 0.1 * jax.random.normal(ks[1], (D,), jnp.float32),        # Conv1d bias
        "ln_g": 1.0 + 0.1 * jax.random.normal(ks[2], (D,), jnp.float32),    # LayerNorm weight
        "ln_b": 0.1 * jax.random.normal(ks[3], (D,), jnp.float32),          # LayerNorm bias
        "up_w": 0.1 * jax.random.normal(ks[4], (D, D, K), jnp.float32),     # ConvTranspose1d weight
        "up_b": 0.1 * jax.random.normal(ks[5], (D,), jnp.float32),          # ConvTranspose1d bias
    }
    x = jax.random.normal(ks[6], (B, L, D), jnp.float32)

    ref = upsample_ref(x, params, down_sample_scale=S)

    # f32 path: tight comparison against the plain-JAX reference.
    out_f32 = jax.block_until_ready(
        upsample_layer(x, params, down_sample_scale=S, compute_dtype=jnp.float32))
    assert out_f32.shape == (B, S * L, D), out_f32.shape
    np.testing.assert_allclose(np.asarray(out_f32), np.asarray(ref), atol=1e-4, rtol=1e-4)

    # Default path: bf16 MXU operands (x cast in-kernel), f32 LN / ELU / accumulation, f32 output.
    out_bf16 = jax.block_until_ready(upsample_layer(x, params, down_sample_scale=S))
    np.testing.assert_allclose(np.asarray(out_bf16), np.asarray(ref), atol=5e-2, rtol=5e-2)

    # Ragged-length path: exercises the cdiv grid, padded-row masking and cross-tile halo.
    L2 = 12
    x2 = jax.random.normal(ks[7], (B, L2, D), jnp.float32)
    ref2 = upsample_ref(x2, params, down_sample_scale=S)
    out2 = jax.block_until_ready(
        upsample_layer(x2, params, down_sample_scale=S, compute_dtype=jnp.float32, row_tile=8))
    assert out2.shape == (B, S * L2, D), out2.shape
    np.testing.assert_allclose(np.asarray(out2), np.asarray(ref2), atol=1e-4, rtol=1e-4)

    print("KERNEL_OK")
</pallas_src>

<mosaic_0001>
module attributes {stable_mosaic.version = 11 : i64} {
  func.func @_upsample_kernel(%arg0: i32, %arg1: i32, %arg2: memref<1x8x128xf32, #tpu.memory_space<vmem>>, %arg3: memref<1x1x1x128xf32, #tpu.memory_space<vmem>>, %arg4: memref<128x128xf32, #tpu.memory_space<vmem>>, %arg5: memref<1x128xf32, #tpu.memory_space<vmem>>, %arg6: memref<1x128xf32, #tpu.memory_space<vmem>>, %arg7: memref<1x128xf32, #tpu.memory_space<vmem>>, %arg8: memref<128x256xf32, #tpu.memory_space<vmem>>, %arg9: memref<128x128xf32, #tpu.memory_space<vmem>>, %arg10: memref<1x256xf32, #tpu.memory_space<vmem>>, %arg11: memref<1x8x256xf32, #tpu.memory_space<vmem>>) attributes {dimension_semantics = [#tpu.dimension_semantics<parallel>, #tpu.dimension_semantics<parallel>], iteration_bounds = array<i64: 2, 1>, scalar_prefetch = 0 : i64, scratch_operands = 0 : i64, tpu.core_type = #tpu.core_type<tc>, window_params = [{transform_indices = @transform_0, window_bounds = array<i64: 1, 8, 128>}, {transform_indices = @transform_1, window_bounds = array<i64: 1, 1, 1, 128>}, {pipeline_mode = #tpu.pipeline_mode<synchronous>, transform_indices = @transform_2, window_bounds = array<i64: 128, 128>}, {pipeline_mode = #tpu.pipeline_mode<synchronous>, transform_indices = @transform_3, window_bounds = array<i64: 1, 128>}, {pipeline_mode = #tpu.pipeline_mode<synchronous>, transform_indices = @transform_4, window_bounds = array<i64: 1, 128>}, {pipeline_mode = #tpu.pipeline_mode<synchronous>, transform_indices = @transform_5, window_bounds = array<i64: 1, 128>}, {pipeline_mode = #tpu.pipeline_mode<synchronous>, transform_indices = @transform_6, window_bounds = array<i64: 128, 256>}, {pipeline_mode = #tpu.pipeline_mode<synchronous>, transform_indices = @transform_7, window_bounds = array<i64: 128, 128>}, {pipeline_mode = #tpu.pipeline_mode<synchronous>, transform_indices = @transform_8, window_bounds = array<i64: 1, 256>}, {transform_indices = @transform_9, window_bounds = array<i64: 1, 8, 256>}]} {
    %c0 = arith.constant 0 : index
    %c0_0 = arith.constant 0 : index
    %c0_1 = arith.constant 0 : index
    %0 = vector.load %arg2[%c0, %c0_0, %c0_1] : memref<1x8x128xf32, #tpu.memory_space<vmem>>, vector<1x8x128xf32>
    %1 = vector.shape_cast %0 : vector<1x8x128xf32> to vector<8x128xf32>
    %c0_2 = arith.constant 0 : index
    %c0_3 = arith.constant 0 : index
    %c0_4 = arith.constant 0 : index
    %c0_5 = arith.constant 0 : index
    %2 = vector.load %arg3[%c0_2, %c0_3, %c0_4, %c0_5] : memref<1x1x1x128xf32, #tpu.memory_space<vmem>>, vector<1x1x1x128xf32>
    %3 = vector.shape_cast %2 : vector<1x1x1x128xf32> to vector<1x128xf32>
    %c0_6 = arith.constant 0 : index
    %c0_7 = arith.constant 0 : index
    %4 = vector.load %arg4[%c0_6, %c0_7] : memref<128x128xf32, #tpu.memory_space<vmem>>, vector<128x128xf32>
    %c0_8 = arith.constant 0 : index
    %c0_9 = arith.constant 0 : index
    %5 = vector.load %arg5[%c0_8, %c0_9] : memref<1x128xf32, #tpu.memory_space<vmem>>, vector<1x128xf32>
    %cst = arith.constant dense<0.000000e+00> : vector<8x128xf32>
    %6 = tpu.matmul %1, %4, %cst {dimension_numbers = #tpu.dot_dimension_numbers<[1], [0], [0], [1], [0, 0, 1, 1], [], []>} : vector<8x128xf32>, vector<128x128xf32>, vector<8x128xf32> -> vector<8x128xf32>
    %7 = vector.broadcast %5 : vector<1x128xf32> to vector<8x128xf32>
    %8 = arith.addf %6, %7 : vector<8x128xf32>
    %cst_10 = arith.constant dense<0.000000e+00> : vector<1x128xf32>
    %9 = tpu.matmul %3, %4, %cst_10 {dimension_numbers = #tpu.dot_dimension_numbers<[1], [0], [0], [1], [0, 0, 1, 1], [], []>} : vector<1x128xf32>, vector<128x128xf32>, vector<1x128xf32> -> vector<1x128xf32>
    %10 = arith.addf %9, %5 : vector<1x128xf32>
    %c0_11 = arith.constant 0 : index
    %c0_12 = arith.constant 0 : index
    %11 = vector.load %arg6[%c0_11, %c0_12] : memref<1x128xf32, #tpu.memory_space<vmem>>, vector<1x128xf32>
    %c0_13 = arith.constant 0 : index
    %c0_14 = arith.constant 0 : index
    %12 = vector.load %arg7[%c0_13, %c0_14] : memref<1x128xf32, #tpu.memory_space<vmem>>, vector<1x128xf32>
    %cst_15 = arith.constant dense<0.000000e+00> : vector<8xf32>
    %13 = vector.multi_reduction <add>, %8, %cst_15 [1] : vector<8x128xf32> to vector<8xf32>
    %14 = vector.shape_cast %13 : vector<8xf32> to vector<8x1xf32>
    %cst_16 = arith.constant 1.280000e+02 : f32
    %15 = vector.broadcast %cst_16 : f32 to vector<8x1xf32>
    %16 = arith.divf %14, %15 : vector<8x1xf32>
    %17 = vector.broadcast %16 : vector<8x1xf32> to vector<8x128xf32>
    %18 = arith.subf %8, %17 : vector<8x128xf32>
    %19 = arith.mulf %18, %18 : vector<8x128xf32>
    %cst_17 = arith.constant dense<0.000000e+00> : vector<8xf32>
    %20 = vector.multi_reduction <add>, %19, %cst_17 [1] : vector<8x128xf32> to vector<8xf32>
    %21 = vector.shape_cast %20 : vector<8xf32> to vector<8x1xf32>
    %cst_18 = arith.constant 1.280000e+02 : f32
    %22 = vector.broadcast %cst_18 : f32 to vector<8x1xf32>
    %23 = arith.divf %21, %22 : vector<8x1xf32>
    %24 = vector.broadcast %16 : vector<8x1xf32> to vector<8x128xf32>
    %25 = arith.subf %8, %24 : vector<8x128xf32>
    %cst_19 = arith.constant 9.99999974E-6 : f32
    %26 = vector.broadcast %cst_19 : f32 to vector<8x1xf32>
    %27 = arith.addf %23, %26 : vector<8x1xf32>
    %28 = math.rsqrt %27 : vector<8x1xf32>
    %29 = vector.broadcast %28 : vector<8x1xf32> to vector<8x128xf32>
    %30 = arith.mulf %25, %29 : vector<8x128xf32>
    %31 = vector.broadcast %11 : vector<1x128xf32> to vector<8x128xf32>
    %32 = arith.mulf %30, %31 : vector<8x128xf32>
    %33 = vector.broadcast %12 : vector<1x128xf32> to vector<8x128xf32>
    %34 = arith.addf %32, %33 : vector<8x128xf32>
    %cst_20 = arith.constant dense<0.000000e+00> : vector<1xf32>
    %35 = vector.multi_reduction <add>, %10, %cst_20 [1] : vector<1x128xf32> to vector<1xf32>
    %36 = vector.shape_cast %35 : vector<1xf32> to vector<1x1xf32>
    %cst_21 = arith.constant 1.280000e+02 : f32
    %37 = vector.broadcast %cst_21 : f32 to vector<1x1xf32>
    %38 = arith.divf %36, %37 : vector<1x1xf32>
    %39 = vector.broadcast %38 : vector<1x1xf32> to vector<1x128xf32>
    %40 = arith.subf %10, %39 : vector<1x128xf32>
    %41 = arith.mulf %40, %40 : vector<1x128xf32>
    %cst_22 = arith.constant dense<0.000000e+00> : vector<1xf32>
    %42 = vector.multi_reduction <add>, %41, %cst_22 [1] : vector<1x128xf32> to vector<1xf32>
    %43 = vector.shape_cast %42 : vector<1xf32> to vector<1x1xf32>
    %cst_23 = arith.constant 1.280000e+02 : f32
    %44 = vector.broadcast %cst_23 : f32 to vector<1x1xf32>
    %45 = arith.divf %43, %44 : vector<1x1xf32>
    %46 = vector.broadcast %38 : vector<1x1xf32> to vector<1x128xf32>
    %47 = arith.subf %10, %46 : vector<1x128xf32>
    %cst_24 = arith.constant 9.99999974E-6 : f32
    %48 = vector.broadcast %cst_24 : f32 to vector<1x1xf32>
    %49 = arith.addf %45, %48 : vector<1x1xf32>
    %50 = math.rsqrt %49 : vector<1x1xf32>
    %51 = vector.broadcast %50 : vector<1x1xf32> to vector<1x128xf32>
    %52 = arith.mulf %47, %51 : vector<1x128xf32>
    %53 = arith.mulf %52, %11 : vector<1x128xf32>
    %54 = arith.addf %53, %12 : vector<1x128xf32>
    %c1_i32 = arith.constant 1 : i32
    %55 = arith.addi %arg1, %c1_i32 : i32
    %c1_i32_25 = arith.constant 1 : i32
    %56 = arith.cmpi slt, %55, %c1_i32_25 : i32
    %57 = arith.extui %56 : i1 to i32
    %58 = arith.sitofp %57 : i32 to f32
    %59 = vector.broadcast %58 : f32 to vector<1x128xf32>
    %60 = arith.mulf %54, %59 : vector<1x128xf32>
    %61 = tpu.iota {dimensions = array<i32: 0>} : vector<8x1xi32>
    %c7_i32 = arith.constant 7 : i32
    %62 = tpu.dynamic_rotate %34 by %c7_i32 dim 0 : vector<8x128xf32>, i32 -> vector<8x128xf32>
    %c7_i32_26 = arith.constant 7 : i32
    %63 = vector.broadcast %c7_i32_26 : i32 to vector<8x1xi32>
    %64 = arith.cmpi eq, %61, %63 : vector<8x1xi32>
    %65 = vector.shape_cast %64 : vector<8x1xi1> to vector<8x1xi1>
    %66 = vector.broadcast %65 : vector<8x1xi1> to vector<8x128xi1>
    %67 = vector.shape_cast %60 : vector<1x128xf32> to vector<1x128xf32>
    %68 = vector.broadcast %67 : vector<1x128xf32> to vector<8x128xf32>
    %69 = arith.select %66, %68, %62 : vector<8x128xi1>, vector<8x128xf32>
    %c0_27 = arith.constant 0 : index
    %c0_28 = arith.constant 0 : index
    %70 = vector.load %arg8[%c0_27, %c0_28] : memref<128x256xf32, #tpu.memory_space<vmem>>, vector<128x256xf32>
    %cst_29 = arith.constant dense<0.000000e+00> : vector<8x256xf32>
    %71 = tpu.matmul %34, %70, %cst_29 {dimension_numbers = #tpu.dot_dimension_numbers<[1], [0], [0], [1], [0, 0, 1, 1], [], []>} : vector<8x128xf32>, vector<128x256xf32>, vector<8x256xf32> -> vector<8x256xf32>
    %c0_30 = arith.constant 0 : index
    %c0_31 = arith.constant 0 : index
    %72 = vector.load %arg9[%c0_30, %c0_31] : memref<128x128xf32, #tpu.memory_space<vmem>>, vector<128x128xf32>
    %cst_32 = arith.constant dense<0.000000e+00> : vector<8x128xf32>
    %73 = tpu.matmul %69, %72, %cst_32 {dimension_numbers = #tpu.dot_dimension_numbers<[1], [0], [0], [1], [0, 0, 1, 1], [], []>} : vector<8x128xf32>, vector<128x128xf32>, vector<8x128xf32> -> vector<8x128xf32>
    %74 = vector.extract_strided_slice %71 {offsets = [0, 0], sizes = [8, 128], strides = [1, 1]} : vector<8x256xf32> to vector<8x128xf32>
    %75 = vector.extract_strided_slice %71 {offsets = [0, 128], sizes = [8, 128], strides = [1, 1]} : vector<8x256xf32> to vector<8x128xf32>
    %76 = arith.addf %75, %73 : vector<8x128xf32>
    %77 = tpu.concatenate %74, %76 in 1 : vector<8x128xf32>, vector<8x128xf32> -> vector<8x256xf32>
    %c0_33 = arith.constant 0 : index
    %c0_34 = arith.constant 0 : index
    %78 = vector.load %arg10[%c0_33, %c0_34] : memref<1x256xf32, #tpu.memory_space<vmem>>, vector<1x256xf32>
    %79 = vector.broadcast %78 : vector<1x256xf32> to vector<8x256xf32>
    %80 = arith.addf %77, %79 : vector<8x256xf32>
    %cst_35 = arith.constant 0.000000e+00 : f32
    %81 = vector.broadcast %cst_35 : f32 to vector<8x256xf32>
    %82 = arith.cmpf ogt, %80, %81 : vector<8x256xf32>
    %cst_36 = arith.constant 0.000000e+00 : f32
    %83 = vector.broadcast %cst_36 : f32 to vector<8x256xf32>
    %84 = arith.minimumf %80, %83 : vector<8x256xf32>
    %85 = math.exp %84 : vector<8x256xf32>
    %cst_37 = arith.constant 1.000000e+00 : f32
    %86 = vector.broadcast %cst_37 : f32 to vector<8x256xf32>
    %87 = arith.subf %85, %86 : vector<8x256xf32>
    %88 = arith.select %82, %80, %87 : vector<8x256xi1>, vector<8x256xf32>
    %c0_38 = arith.constant 0 : index
    %c0_39 = arith.constant 0 : index
    %c0_40 = arith.constant 0 : index
    %89 = vector.load %arg11[%c0_38, %c0_39, %c0_40] : memref<1x8x256xf32, #tpu.memory_space<vmem>>, vector<1x8x256xf32>
    %90 = vector.shape_cast %89 : vector<1x8x256xf32> to vector<8x256xf32>
    %91 = vector.shape_cast %88 : vector<8x256xf32> to vector<1x8x256xf32>
    tpu.vector_store %arg11[%c0_38, %c0_39, %c0_40], %91 {strides = array<i32>} : memref<1x8x256xf32, #tpu.memory_space<vmem>>, vector<1x8x256xf32>,
    return
  }
  func.func @transform_0(%arg0: i32, %arg1: i32) -> (i32, i32, i32) {
    %c0_i32 = arith.constant 0 : i32
    %c0_i32_0 = arith.constant 0 : i32
    return %arg0, %arg1, %c0_i32 : i32, i32, i32
  }
  func.func @transform_1(%arg0: i32, %arg1: i32) -> (i32, i32, i32, i32) {
    %c0_i32 = arith.constant 0 : i32
    %c0_i32_0 = arith.constant 0 : i32
    %c0_i32_1 = arith.constant 0 : i32
    return %arg0, %arg1, %c0_i32, %c0_i32_0 : i32, i32, i32, i32
  }
  func.func @transform_2(%arg0: i32, %arg1: i32) -> (i32, i32) {
    %c0_i32 = arith.constant 0 : i32
    %c0_i32_0 = arith.constant 0 : i32
    %c0_i32_1 = arith.constant 0 : i32
    return %c0_i32, %c0_i32_0 : i32, i32
  }
  func.func @transform_3(%arg0: i32, %arg1: i32) -> (i32, i32) {
    %c0_i32 = arith.constant 0 : i32
    %c0_i32_0 = arith.constant 0 : i32
    %c0_i32_1 = arith.constant 0 : i32
    return %c0_i32, %c0_i32_0 : i32, i32
  }
  func.func @transform_4(%arg0: i32, %arg1: i32) -> (i32, i32) {
    %c0_i32 = arith.constant 0 : i32
    %c0_i32_0 = arith.constant 0 : i32
    %c0_i32_1 = arith.constant 0 : i32
    return %c0_i32, %c0_i32_0 : i32, i32
  }
  func.func @transform_5(%arg0: i32, %arg1: i32) -> (i32, i32) {
    %c0_i32 = arith.constant 0 : i32
    %c0_i32_0 = arith.constant 0 : i32
    %c0_i32_1 = arith.constant 0 : i32
    return %c0_i32, %c0_i32_0 : i32, i32
  }
  func.func @transform_6(%arg0: i32, %arg1: i32) -> (i32, i32) {
    %c0_i32 = arith.constant 0 : i32
    %c0_i32_0 = arith.constant 0 : i32
    %c0_i32_1 = arith.constant 0 : i32
    return %c0_i32, %c0_i32_0 : i32, i32
  }
  func.func @transform_7(%arg0: i32, %arg1: i32) -> (i32, i32) {
    %c0_i32 = arith.constant 0 : i32
    %c0_i32_0 = arith.constant 0 : i32
    %c0_i32_1 = arith.constant 0 : i32
    return %c0_i32, %c0_i32_0 : i32, i32
  }
  func.func @transform_8(%arg0: i32, %arg1: i32) -> (i32, i32) {
    %c0_i32 = arith.constant 0 : i32
    %c0_i32_0 = arith.constant 0 : i32
    %c0_i32_1 = arith.constant 0 : i32
    return %c0_i32, %c0_i32_0 : i32, i32
  }
  func.func @transform_9(%arg0: i32, %arg1: i32) -> (i32, i32, i32) {
    %c0_i32 = arith.constant 0 : i32
    %c0_i32_0 = arith.constant 0 : i32
    return %arg0, %arg1, %c0_i32 : i32, i32, i32
  }
}

</mosaic_0001>

<llo_original>
// kernel: tpu_custom_call.1
$region0: #{tpu_custom_call.1}
  #allocation0 [shape = 'u32[]', space=smem, size = 0x4, offset = 0x4, fixed_abs, tag = 'smem constant byte address 0x4 - core index']
  #allocation1 [shape = 'u32[72,128]{1,0:T(1,128)}', space=vmem, size = 0x9000, scoped, tag = 'internal scratch']
  %s0 = inlined_call_operand.hbm [shape: f32[2,8,128], index: 0, kind: input, shape index: {}]
  %s1 = inlined_call_operand.hbm [shape: f32[2,1,1,128], index: 1, kind: input, shape index: {}]
  %s2 = inlined_call_operand.hbm [shape: f32[128,128], index: 2, kind: input, shape index: {}]
  %s3 = inlined_call_operand.vmem [shape: f32[1,128], index: 3, kind: input, shape index: {}]
  %s4 = inlined_call_operand.hbm [shape: f32[1,128], index: 4, kind: input, shape index: {}]
  %s5 = inlined_call_operand.vmem [shape: f32[1,128], index: 5, kind: input, shape index: {}]
  %s6 = inlined_call_operand.hbm [shape: f32[128,256], index: 6, kind: input, shape index: {}]
  %s7 = inlined_call_operand.hbm [shape: f32[128,128], index: 7, kind: input, shape index: {}]
  %s8 = inlined_call_operand.vmem [shape: f32[1,256], index: 8, kind: input, shape index: {}]
  %s9 = inlined_call_operand.hbm [shape: f32[2,8,256], index: 9, kind: output, shape index: {}]
  %s10 = sld [smem:[#allocation0]]
  $region93: #{tpu_custom_call.1} parent=0
    _
  %s12 = ssub.s32 1, %s10
  %s13 = scalar_select 0, %s12, %s10
  $region1: #{tpu_custom_call.1} parent=0
    #allocation2 [shape = 'u8[8192]{0}', space=vmem, size = 0x2000, scoped, tag = 'input window, operand 0']
    #allocation3 [shape = 's32[2]{0}', space=sflag, size = 0x8, scoped, tag = 'scoped memory for tpu_custom_call.1']
    #allocation4 [shape = 's32[2]{0}', space=sflag, size = 0x8, scoped, tag = 'scoped memory for tpu_custom_call.1']
    #allocation5 [shape = 'u8[1024]{0}', space=vmem, size = 0x400, scoped, tag = 'input window, operand 1']
    #allocation6 [shape = 's32[2]{0}', space=sflag, size = 0x8, scoped, tag = 'scoped memory for tpu_custom_call.1']
    #allocation7 [shape = 'u8[65536]{0}', space=vmem, size = 0x10000, scoped, tag = 'input window, operand 2, single buffered']
    #allocation8 [shape = 'u8[512]{0}', space=vmem, size = 0x400, scoped, tag = 'input window, operand 4, single buffered']
    #allocation9 [shape = 's32[1]{0}', space=sflag, size = 0x4, scoped, tag = 'scoped memory for tpu_custom_call.1']
    #allocation10 [shape = 'u8[131072]{0}', space=vmem, size = 0x20000, scoped, tag = 'input window, operand 6, single buffered']
    #allocation11 [shape = 'u8[65536]{0}', space=vmem, size = 0x10000, scoped, tag = 'input window, operand 7, single buffered']
    #allocation12 [shape = 's32[1]{0}', space=sflag, size = 0x4, scoped, tag = 'scoped memory for tpu_custom_call.1']
    #allocation13 [shape = 'u8[16384]{0}', space=vmem, size = 0x4000, scoped, tag = 'output window, operand 0']
    %14 = vsyncpa [#allocation3], 0
    %s15 = scalar_lea.sflag [#allocation3], 1
    %16 = vsyncpa %s15, 0
    %17 = vsyncpa [#allocation6], 0
    %s18 = scalar_lea.sflag [#allocation6], 1
    %19 = vsyncpa %s18, 0
    %20 = vsyncpa [#allocation9], 0
    %21 = vsyncpa [#allocation12], 0
    %22 = vsyncpa [#allocation4], 0
    %s23 = scalar_lea.sflag [#allocation4], 1
    %24 = vsyncpa %s23, 0
    loop: start=0, step=1, limit=4
    $region2: #{tpu_custom_call.1} parent=1 // loop_pre_header
      _
    $region3: #{tpu_custom_call.1} parent=1 // loop_header
      %s26 = sphi 0, %s30
      %p27 = scmp.ge.s32.totalorder %s26, 4
      %s33 = sphi 0, %s45
      %s34 = sphi 0, %s41
      %s35 = sphi 0, %s33
      %s36 = sphi 0, %s34
      %s37 = sphi 0, %s35
      %s38 = sphi 0, %s36
      %s50 = sphi 0, %s52
      %s53 = sphi 0, %s50
      %s54 = sphi 0, %s53
      %s70 = sphi 0, %s54
      %s78 = sphi 0, %s80
      %s81 = sphi 0, %s78
      %s82 = sphi 0, %s81
      %s98 = sphi 0, %s82
      %s102 = sphi 0, %s102
      %s104 = sphi 0, %s102
      %s105 = sphi 0, %s104
      %s119 = sphi 0, %s105
      %s123 = sphi 0, %s123
      %s125 = sphi 0, %s123
      %s126 = sphi 0, %s125
      %s140 = sphi 0, %s126
      %s144 = sphi 0, %s144
      %s146 = sphi 0, %s144
      %s147 = sphi 0, %s146
      %s161 = sphi 0, %s147
      %s165 = sphi 0, %s165
      %s167 = sphi 0, %s165
      %s168 = sphi 0, %s167
      %s182 = sphi 0, %s168
      %s186 = sphi 0, %s186
      %s188 = sphi 0, %s186
      %s189 = sphi 0, %s188
      %s203 = sphi 0, %s189
      %s207 = sphi 0, %s207
      %s209 = sphi 0, %s207
      %s210 = sphi 0, %s209
      %s224 = sphi 0, %s210
      %s228 = sphi 0, %s228
      %s230 = sphi 0, %s228
      %s231 = sphi 0, %s230
      %s245 = sphi 0, %s231
      %s253 = sphi 0, %s255
      %s256 = sphi 0, %s253
      %s257 = sphi 0, %s256
      %s273 = sphi 0, %s257
    $region4: #{tpu_custom_call.1} parent=1 // loop_header_branch
      %29 = sbr.rel (%p27) target = $region8
    $region5: #{tpu_custom_call.1} parent=1 // loop_body
      %s31 = ssub.s32 %s26, 1
      %s32 = ssub.s32 %s26, 2
      %s39 = sadd.s32 1, %s34
      %p40 = scmp.ge.s32.totalorder %s39, 1
      %s41 = scalar_select %p40, 0, %s39
      %s42 = sadd.s32 1, %s33
      %s43 = scalar_select %p40, %s42, %s33
      %p44 = scmp.ge.s32.totalorder %s43, 2
      %s45 = scalar_select %p44, 0, %s43
      %s46 = ssub.s32 %s33, %s45
      %s47 = ssub.s32 %s34, %s41
      %s48 = sor.u32 %s46, %s47
      %p49 = scmp.eq.s32.totalorder %s48, 0
      %s51 = sadd.s32 %s50, 1
      %s52 = scalar_select %p49, %s50, %s51
      %p55 = pneg %p49
      %p56 = scmp.eq.s32.totalorder %s26, 1
      %p57 = por %p55, %p56
      %p58 = scmp.ne.s32.totalorder %s50, %s53
      %p59 = scmp.eq.s32.totalorder %s26, 0
      %p60 = por %p58, %p59
      %p61 = scmp.ne.s32.totalorder %s50, %s53
      %p62 = scmp.eq.s32.totalorder %s31, 1
      %p63 = por %p61, %p62
      %p64 = scmp.ne.s32.totalorder %s53, %s54
      %p65 = scmp.eq.s32.totalorder %s31, 0
      %p66 = por %p64, %p65
      %p67 = scmp.ne.s32.totalorder %s53, %s54
      %p68 = scmp.eq.s32.totalorder %s32, 1
      %p69 = por %p67, %p68
      %p71 = scmp.ne.s32.totalorder %s54, %s70
      %p72 = scmp.eq.s32.totalorder %s32, 0
      %p73 = por %p71, %p72
      %s74 = ssub.s32 %s33, %s45
      %s75 = ssub.s32 %s34, %s41
      %s76 = sor.u32 %s74, %s75
      %p77 = scmp.eq.s32.totalorder %s76, 0
      %s79 = sadd.s32 %s78, 1
      %s80 = scalar_select %p77, %s78, %s79
      %p83 = pneg %p77
      %p84 = scmp.eq.s32.totalorder %s26, 1
      %p85 = por %p83, %p84
      %p86 = scmp.ne.s32.totalorder %s78, %s81
      %p87 = scmp.eq.s32.totalorder %s26, 0
      %p88 = por %p86, %p87
      %p89 = scmp.ne.s32.totalorder %s78, %s81
      %p90 = scmp.eq.s32.totalorder %s31, 1
      %p91 = por %p89, %p90
      %p92 = scmp.ne.s32.totalorder %s81, %s82
      %p93 = scmp.eq.s32.totalorder %s31, 0
      %p94 = por %p92, %p93
      %p95 = scmp.ne.s32.totalorder %s81, %s82
      %p96 = scmp.eq.s32.totalorder %s32, 1
      %p97 = por %p95, %p96
      %p99 = scmp.ne.s32.totalorder %s82, %s98
      %p100 = scmp.eq.s32.totalorder %s32, 0
      %p101 = por %p99, %p100
      %s103 = sadd.s32 %s102, 1
      %p106 = scmp.eq.s32.totalorder %s26, 1
      %p107 = scmp.ne.s32.totalorder %s102, %s104
      %p108 = scmp.eq.s32.totalorder %s26, 0
      %p109 = por %p107, %p108
      %p110 = scmp.ne.s32.totalorder %s102, %s104
      %p111 = scmp.eq.s32.totalorder %s31, 1
      %p112 = por %p110, %p111
      %p113 = scmp.ne.s32.totalorder %s104, %s105
      %p114 = scmp.eq.s32.totalorder %s31, 0
      %p115 = por %p113, %p114
      %p116 = scmp.ne.s32.totalorder %s104, %s105
      %p117 = scmp.eq.s32.totalorder %s32, 1
      %p118 = por %p116, %p117
      %p120 = scmp.ne.s32.totalorder %s105, %s119
      %p121 = scmp.eq.s32.totalorder %s32, 0
      %p122 = por %p120, %p121
      %s124 = sadd.s32 %s123, 1
      %p127 = scmp.eq.s32.totalorder %s26, 1
      %p128 = scmp.ne.s32.totalorder %s123, %s125
      %p129 = scmp.eq.s32.totalorder %s26, 0
      %p130 = por %p128, %p129
      %p131 = scmp.ne.s32.totalorder %s123, %s125
      %p132 = scmp.eq.s32.totalorder %s31, 1
      %p133 = por %p131, %p132
      %p134 = scmp.ne.s32.totalorder %s125, %s126
      %p135 = scmp.eq.s32.totalorder %s31, 0
      %p136 = por %p134, %p135
      %p137 = scmp.ne.s32.totalorder %s125, %s126
      %p138 = scmp.eq.s32.totalorder %s32, 1
      %p139 = por %p137, %p138
      %p141 = scmp.ne.s32.totalorder %s126, %s140
      %p142 = scmp.eq.s32.totalorder %s32, 0
      %p143 = por %p141, %p142
      %s145 = sadd.s32 %s144, 1
      %p148 = scmp.eq.s32.totalorder %s26, 1
      %p149 = scmp.ne.s32.totalorder %s144, %s146
      %p150 = scmp.eq.s32.totalorder %s26, 0
      %p151 = por %p149, %p150
      %p152 = scmp.ne.s32.totalorder %s144, %s146
      %p153 = scmp.eq.s32.totalorder %s31, 1
      %p154 = por %p152, %p153
      %p155 = scmp.ne.s32.totalorder %s146, %s147
      %p156 = scmp.eq.s32.totalorder %s31, 0
      %p157 = por %p155, %p156
      %p158 = scmp.ne.s32.totalorder %s146, %s147
      %p159 = scmp.eq.s32.totalorder %s32, 1
      %p160 = por %p158, %p159
      %p162 = scmp.ne.s32.totalorder %s147, %s161
      %p163 = scmp.eq.s32.totalorder %s32, 0
      %p164 = por %p162, %p163
      %s166 = sadd.s32 %s165, 1
      %p169 = scmp.eq.s32.totalorder %s26, 1
      %p170 = scmp.ne.s32.totalorder %s165, %s167
      %p171 = scmp.eq.s32.totalorder %s26, 0
      %p172 = por %p170, %p171
      %p173 = scmp.ne.s32.totalorder %s165, %s167
      %p174 = scmp.eq.s32.totalorder %s31, 1
      %p175 = por %p173, %p174
      %p176 = scmp.ne.s32.totalorder %s167, %s168
      %p177 = scmp.eq.s32.totalorder %s31, 0
      %p178 = por %p176, %p177
      %p179 = scmp.ne.s32.totalorder %s167, %s168
      %p180 = scmp.eq.s32.totalorder %s32, 1
      %p181 = por %p179, %p180
      %p183 = scmp.ne.s32.totalorder %s168, %s182
      %p184 = scmp.eq.s32.totalorder %s32, 0
      %p185 = por %p183, %p184
      %s187 = sadd.s32 %s186, 1
      %p190 = scmp.eq.s32.totalorder %s26, 1
      %p191 = scmp.ne.s32.totalorder %s186, %s188
      %p192 = scmp.eq.s32.totalorder %s26, 0
      %p193 = por %p191, %p192
      %p194 = scmp.ne.s32.totalorder %s186, %s188
      %p195 = scmp.eq.s32.totalorder %s31, 1
      %p196 = por %p194, %p195
      %p197 = scmp.ne.s32.totalorder %s188, %s189
      %p198 = scmp.eq.s32.totalorder %s31, 0
      %p199 = por %p197, %p198
      %p200 = scmp.ne.s32.totalorder %s188, %s189
      %p201 = scmp.eq.s32.totalorder %s32, 1
      %p202 = por %p200, %p201
      %p204 = scmp.ne.s32.totalorder %s189, %s203
      %p205 = scmp.eq.s32.totalorder %s32, 0
      %p206 = por %p204, %p205
      %s208 = sadd.s32 %s207, 1
      %p211 = scmp.eq.s32.totalorder %s26, 1
      %p212 = scmp.ne.s32.totalorder %s207, %s209
      %p213 = scmp.eq.s32.totalorder %s26, 0
      %p214 = por %p212, %p213
      %p215 = scmp.ne.s32.totalorder %s207, %s209
      %p216 = scmp.eq.s32.totalorder %s31, 1
      %p217 = por %p215, %p216
      %p218 = scmp.ne.s32.totalorder %s209, %s210
      %p219 = scmp.eq.s32.totalorder %s31, 0
      %p220 = por %p218, %p219
      %p221 = scmp.ne.s32.totalorder %s209, %s210
      %p222 = scmp.eq.s32.totalorder %s32, 1
      %p223 = por %p221, %p222
      %p225 = scmp.ne.s32.totalorder %s210, %s224
      %p226 = scmp.eq.s32.totalorder %s32, 0
      %p227 = por %p225, %p226
      %s229 = sadd.s32 %s228, 1
      %p232 = scmp.eq.s32.totalorder %s26, 1
      %p233 = scmp.ne.s32.totalorder %s228, %s230
      %p234 = scmp.eq.s32.totalorder %s26, 0
      %p235 = por %p233, %p234
      %p236 = scmp.ne.s32.totalorder %s228, %s230
      %p237 = scmp.eq.s32.totalorder %s31, 1
      %p238 = por %p236, %p237
      %p239 = scmp.ne.s32.totalorder %s230, %s231
      %p240 = scmp.eq.s32.totalorder %s31, 0
      %p241 = por %p239, %p240
      %p242 = scmp.ne.s32.totalorder %s230, %s231
      %p243 = scmp.eq.s32.totalorder %s32, 1
      %p244 = por %p242, %p243
      %p246 = scmp.ne.s32.totalorder %s231, %s245
      %p247 = scmp.eq.s32.totalorder %s32, 0
      %p248 = por %p246, %p247
      %s249 = ssub.s32 %s33, %s45
      %s250 = ssub.s32 %s34, %s41
      %s251 = sor.u32 %s249, %s250
      %p252 = scmp.eq.s32.totalorder %s251, 0
      %s254 = sadd.s32 %s253, 1
      %s255 = scalar_select %p252, %s253, %s254
      %p258 = pneg %p252
      %p259 = scmp.eq.s32.totalorder %s26, 1
      %p260 = por %p258, %p259
      %p261 = scmp.ne.s32.totalorder %s253, %s256
      %p262 = scmp.eq.s32.totalorder %s26, 0
      %p263 = por %p261, %p262
      %p264 = scmp.ne.s32.totalorder %s253, %s256
      %p265 = scmp.eq.s32.totalorder %s31, 1
      %p266 = por %p264, %p265
      %p267 = scmp.ne.s32.totalorder %s256, %s257
      %p268 = scmp.eq.s32.totalorder %s31, 0
      %p269 = por %p267, %p268
      %p270 = scmp.ne.s32.totalorder %s256, %s257
      %p271 = scmp.eq.s32.totalorder %s32, 1
      %p272 = por %p270, %p271
      %p274 = scmp.ne.s32.totalorder %s257, %s273
      %p275 = scmp.eq.s32.totalorder %s32, 0
      %p276 = por %p274, %p275
      %p277 = scmp.le.s32.totalorder 1, %s26
      %p278 = scmp.lt.s32.totalorder %s26, 3
      %p279 = pnand %p277, %p278
      %p280 = pneg %p279
      // Predicated region
      $region9: #{tpu_custom_call.1} parent=5 // pred_check
        _
      $region10: #{tpu_custom_call.1} parent=5 // pred_check_branch
        %282 = sbr.rel (%p279) target = $region12
      $region11: #{tpu_custom_call.1} parent=5 // pred_region
        %s283 = ssub.s32 %s26, 1
        // Predicated region
        $region13: #{tpu_custom_call.1} parent=11 // pred_check
          %p284 = pneg %p115
        $region14: #{tpu_custom_call.1} parent=11 // pred_check_branch
          %286 = sbr.rel (%p284) target = $region16
        $region15: #{tpu_custom_call.1} parent=11 // pred_region
          %288 = vsyncadd [#allocation6], 0
          %s289 = sshll.u32 %s2, 4
          %s290 = int_to_ptr.hbm [resolvable:$true] %s289
          %s291 = sshll.u32 [#allocation7], 4
          %s292 = int_to_ptr.vmem [resolvable:$true] %s291
          %297 = dma.hbm_to_vmem [thread:$0]  %s290, 2048, %s292, [#allocation6], 128, 128, 8
        $region16: #{tpu_custom_call.1} parent=11 // pred_fallthru
          _
        // Predicated region
        $region17: #{tpu_custom_call.1} parent=11 // pred_check
          %p298 = pneg %p136
        $region18: #{tpu_custom_call.1} parent=11 // pred_check_branch
          %300 = sbr.rel (%p298) target = $region20
        $region19: #{tpu_custom_call.1} parent=11 // pred_region
          _
        $region20: #{tpu_custom_call.1} parent=11 // pred_fallthru
          _
        // Predicated region
        $region21: #{tpu_custom_call.1} parent=11 // pred_check
          %p301 = pneg %p157
        $region22: #{tpu_custom_call.1} parent=11 // pred_check_branch
          %303 = sbr.rel (%p301) target = $region24
        $region23: #{tpu_custom_call.1} parent=11 // pred_region
          %305 = vsyncadd [#allocation9], 0
          %s307 = sshll.u32 %s4, 4
          %s308 = int_to_ptr.hbm [resolvable:$true] %s307
          %s309 = sshll.u32 [#allocation8], 4
          %s310 = int_to_ptr.vmem [resolvable:$true] %s309
          %312 = dma.hbm_to_vmem [thread:$0]  %s308, 16, %s310, [#allocation9]
        $region24: #{tpu_custom_call.1} parent=11 // pred_fallthru
          _
        // Predicated region
        $region25: #{tpu_custom_call.1} parent=11 // pred_check
          %p313 = pneg %p178
        $region26: #{tpu_custom_call.1} parent=11 // pred_check_branch
          %315 = sbr.rel (%p313) target = $region28
        $region27: #{tpu_custom_call.1} parent=11 // pred_region
          _
        $region28: #{tpu_custom_call.1} parent=11 // pred_fallthru
          _
        // Predicated region
        $region29: #{tpu_custom_call.1} parent=11 // pred_check
          %p316 = pneg %p199
        $region30: #{tpu_custom_call.1} parent=11 // pred_check_branch
          %318 = sbr.rel (%p316) target = $region32
        $region31: #{tpu_custom_call.1} parent=11 // pred_region
          %320 = vsyncadd [#allocation9], 0
          %s321 = sshll.u32 %s6, 4
          %s322 = int_to_ptr.hbm [resolvable:$true] %s321
          %s323 = sshll.u32 [#allocation10], 4
          %s324 = int_to_ptr.vmem [resolvable:$true] %s323
          %329 = dma.hbm_to_vmem [thread:$0]  %s322, 4096, %s324, [#allocation9], 256, 256, 16
        $region32: #{tpu_custom_call.1} parent=11 // pred_fallthru
          _
        // Predicated region
        $region33: #{tpu_custom_call.1} parent=11 // pred_check
          %p330 = pneg %p220
        $region34: #{tpu_custom_call.1} parent=11 // pred_check_branch
          %332 = sbr.rel (%p330) target = $region36
        $region35: #{tpu_custom_call.1} parent=11 // pred_region
          %334 = vsyncadd [#allocation12], 0
          %s335 = sshll.u32 %s7, 4
          %s336 = int_to_ptr.hbm [resolvable:$true] %s335
          %s337 = sshll.u32 [#allocation11], 4
          %s338 = int_to_ptr.vmem [resolvable:$true] %s337
          %343 = dma.hbm_to_vmem [thread:$0]  %s336, 2048, %s338, [#allocation12], 128, 128, 8
        $region36: #{tpu_custom_call.1} parent=11 // pred_fallthru
          _
        // Predicated region
        $region37: #{tpu_custom_call.1} parent=11 // pred_check
          %p344 = pneg %p241
        $region38: #{tpu_custom_call.1} parent=11 // pred_check_branch
          %346 = sbr.rel (%p344) target = $region40
        $region39: #{tpu_custom_call.1} parent=11 // pred_region
          _
        $region40: #{tpu_custom_call.1} parent=11 // pred_fallthru
          _
      $region12: #{tpu_custom_call.1} parent=5 // pred_fallthru
        _
      %p347 = scmp.lt.s32.totalorder %s26, 2
      // Predicated region
      $region41: #{tpu_custom_call.1} parent=5 // pred_check
        %p348 = pneg %p347
      $region42: #{tpu_custom_call.1} parent=5 // pred_check_branch
        %350 = sbr.rel (%p348) target = $region44
      $region43: #{tpu_custom_call.1} parent=5 // pred_region
        // Predicated region
        $region45: #{tpu_custom_call.1} parent=43 // pred_check
          %p351 = pneg %p60
        $region46: #{tpu_custom_call.1} parent=43 // pred_check_branch
          %353 = sbr.rel (%p351) target = $region48
        $region47: #{tpu_custom_call.1} parent=43 // pred_region
          %s354 = sand.u32 %s50, 1
          %s355 = scalar_lea.sflag [#allocation3], %s354
          %s356 = sand.u32 %s50, 1
          %s357 = smul.addr %s356, 8
          %s358 = scalar_lea.vmem [#allocation2], %s357
          %360 = vsyncadd %s355, 0
          %s361 = sadd.s32 %s34, %s33
          %s362 = smul.addr %s361, 8
          %s363 = scalar_lea.hbm %s0, %s362
          %s365 = sshll.u32 %s363, 4
          %s366 = int_to_ptr.hbm [resolvable:$true] %s365
          %s367 = sshll.u32 %s358, 4
          %s368 = int_to_ptr.vmem [resolvable:$true] %s367
          %370 = dma.hbm_to_vmem [thread:$0]  %s366, 128, %s368, %s355
        $region48: #{tpu_custom_call.1} parent=43 // pred_fallthru
          _
        // Predicated region
        $region49: #{tpu_custom_call.1} parent=43 // pred_check
          %p371 = pneg %p88
        $region50: #{tpu_custom_call.1} parent=43 // pred_check_branch
          %373 = sbr.rel (%p371) target = $region52
        $region51: #{tpu_custom_call.1} parent=43 // pred_region
          %s374 = sand.u32 %s26, 1
          %s375 = scalar_lea.sflag [#allocation6], %s374
          %s376 = sand.u32 %s78, 1
          %s377 = scalar_lea.vmem [#allocation5], %s376
          %379 = vsyncadd %s375, 0
          %s380 = sadd.s32 %s34, %s33
          %s381 = scalar_lea.hbm %s1, %s380
          %s383 = sshll.u32 %s381, 4
          %s384 = int_to_ptr.hbm [resolvable:$true] %s383
          %s385 = sshll.u32 %s377, 4
          %s386 = int_to_ptr.vmem [resolvable:$true] %s385
          %388 = dma.hbm_to_vmem [thread:$0]  %s384, 16, %s386, %s375
        $region52: #{tpu_custom_call.1} parent=43 // pred_fallthru
          _
      $region44: #{tpu_custom_call.1} parent=5 // pred_fallthru
        _
      %p389 = scmp.le.s32.totalorder 1, %s26
      %p390 = scmp.lt.s32.totalorder %s26, 3
      %p391 = pnand %p389, %p390
      %p392 = pneg %p391
      // Predicated region
      $region53: #{tpu_custom_call.1} parent=5 // pred_check
        _
      $region54: #{tpu_custom_call.1} parent=5 // pred_check_branch
        %394 = sbr.rel (%p391) target = $region56
      $region55: #{tpu_custom_call.1} parent=5 // pred_region
        %s395 = ssub.s32 %s26, 1
        %s396 = sand.u32 %s53, 1
        %s397 = scalar_lea.sflag [#allocation3], %s396
        %s398 = sand.u32 %s53, 1
        %s399 = smul.addr %s398, 8
        %s400 = scalar_lea.vmem [#allocation2], %s399
        // Predicated region
        $region57: #{tpu_custom_call.1} parent=55 // pred_check
          %p401 = pneg %p66
        $region58: #{tpu_custom_call.1} parent=55 // pred_check_branch
          %403 = sbr.rel (%p401) target = $region60
        $region59: #{tpu_custom_call.1} parent=55 // pred_region
          %405 = dma.done %s397, 128
        $region60: #{tpu_custom_call.1} parent=55 // pred_fallthru
          _
        %s406 = sand.u32 %s31, 1
        %s407 = scalar_lea.sflag [#allocation6], %s406
        %s408 = sand.u32 %s81, 1
        %s409 = scalar_lea.vmem [#allocation5], %s408
        // Predicated region
        $region61: #{tpu_custom_call.1} parent=55 // pred_check
          %p410 = pneg %p94
        $region62: #{tpu_custom_call.1} parent=55 // pred_check_branch
          %412 = sbr.rel (%p410) target = $region64
        $region63: #{tpu_custom_call.1} parent=55 // pred_region
          %414 = dma.done %s407, 16
        $region64: #{tpu_custom_call.1} parent=55 // pred_fallthru
          _
        // Predicated region
        $region65: #{tpu_custom_call.1} parent=55 // pred_check
          %p415 = pneg %p115
        $region66: #{tpu_custom_call.1} parent=55 // pred_check_branch
          %417 = sbr.rel (%p415) target = $region68
        $region67: #{tpu_custom_call.1} parent=55 // pred_region
          %419 = dma.done [#allocation6], 2048
        $region68: #{tpu_custom_call.1} parent=55 // pred_fallthru
          _
        // Predicated region
        $region69: #{tpu_custom_call.1} parent=55 // pred_check
          %p420 = pneg %p157
        $region70: #{tpu_custom_call.1} parent=55 // pred_check_branch
          %422 = sbr.rel (%p420) target = $region72
        $region71: #{tpu_custom_call.1} parent=55 // pred_region
          %424 = dma.done [#allocation9], 16
        $region72: #{tpu_custom_call.1} parent=55 // pred_fallthru
          _
        // Predicated region
        $region73: #{tpu_custom_call.1} parent=55 // pred_check
          %p425 = pneg %p199
        $region74: #{tpu_custom_call.1} parent=55 // pred_check_branch
          %427 = sbr.rel (%p425) target = $region76
        $region75: #{tpu_custom_call.1} parent=55 // pred_region
          %429 = dma.done [#allocation9], 4096
        $region76: #{tpu_custom_call.1} parent=55 // pred_fallthru
          _
        // Predicated region
        $region77: #{tpu_custom_call.1} parent=55 // pred_check
          %p430 = pneg %p220
        $region78: #{tpu_custom_call.1} parent=55 // pred_check_branch
          %432 = sbr.rel (%p430) target = $region80
        $region79: #{tpu_custom_call.1} parent=55 // pred_region
          %434 = dma.done [#allocation12], 2048
        $region80: #{tpu_custom_call.1} parent=55 // pred_fallthru
          _
        %s435 = sand.u32 %s53, 1
        %s436 = scalar_lea.sflag [#allocation3], %s435
        %s437 = sand.u32 %s53, 1
        %s438 = smul.addr %s437, 8
        %s439 = scalar_lea.vmem [#allocation2], %s438
        %p440 = pneg %p66
        %p441 = pneg %p63
        %s442 = sand.u32 %s31, 1
        %s443 = scalar_lea.sflag [#allocation6], %s442
        %s444 = sand.u32 %s81, 1
        %s445 = scalar_lea.vmem [#allocation5], %s444
        %p446 = pneg %p94
        %p447 = pneg %p91
        %p448 = pneg %p115
        %p449 = pneg %p112
        %p450 = pneg %p136
        %p451 = pneg %p133
        %p452 = pneg %p157
        %p453 = pneg %p154
        %p454 = pneg %p178
        %p455 = pneg %p175
        %p456 = pneg %p199
        %p457 = pneg %p196
        %p458 = pneg %p220
        %p459 = pneg %p217
        %p460 = pneg %p241
        %p461 = pneg %p238
        %p462 = pneg %p269
        %p463 = pneg %p266
        %s464 = sand.u32 %s256, 1
        %s465 = scalar_lea.sflag [#allocation4], %s464
        %s466 = sand.u32 %s256, 1
        %s467 = smul.addr %s466, 16
        %s468 = scalar_lea.vmem [#allocation13], %s467
        %v469 = vld [vmem:[%s400] sm:$0xff]
        %v470 = vld [vmem:[%s409] sm:$0x1]
        %v471 = vld [vmem:[#allocation7] sm:$0xff]
        %v472 = vld [vmem:[#allocation7 + $0x8] sm:$0xff]
        %v473 = vld [vmem:[#allocation7 + $0x10] sm:$0xff]
        %v474 = vld [vmem:[#allocation7 + $0x18] sm:$0xff]
        %v475 = vld [vmem:[#allocation7 + $0x20] sm:$0xff]
        %v476 = vld [vmem:[#allocation7 + $0x28] sm:$0xff]
        %v477 = vld [vmem:[#allocation7 + $0x30] sm:$0xff]
        %v478 = vld [vmem:[#allocation7 + $0x38] sm:$0xff]
        %v479 = vld [vmem:[#allocation7 + $0x40] sm:$0xff]
        %v480 = vld [vmem:[#allocation7 + $0x48] sm:$0xff]
        %v481 = vld [vmem:[#allocation7 + $0x50] sm:$0xff]
        %v482 = vld [vmem:[#allocation7 + $0x58] sm:$0xff]
        %v483 = vld [vmem:[#allocation7 + $0x60] sm:$0xff]
        %v484 = vld [vmem:[#allocation7 + $0x68] sm:$0xff]
        %v485 = vld [vmem:[#allocation7 + $0x70] sm:$0xff]
        %v486 = vld [vmem:[#allocation7 + $0x78] sm:$0xff]
        %v487 = vld [vmem:[%s3] sm:$0x1]
        %v489 = vperm.slane %v487, 0
        %491 = vmatpush.msra.mxu0 %v486
        %492 = vmatpush.msra.mxu0 %v485
        %493 = vmatpush.msra.mxu0 %v484
        %494 = vmatpush.msra.mxu0 %v483
        %495 = vmatpush.msra.mxu0 %v482
        %496 = vmatpush.msra.mxu0 %v481
        %497 = vmatpush.msra.mxu0 %v480
        %498 = vmatpush.msra.mxu0 %v479
        %499 = vmatpush.msra.mxu0 %v478
        %500 = vmatpush.msra.mxu0 %v477
        %501 = vmatpush.msra.mxu0 %v476
        %502 = vmatpush.msra.mxu0 %v475
        %503 = vmatpush.msra.mxu0 %v474
        %504 = vmatpush.msra.mxu0 %v473
        %505 = vmatpush.msra.mxu0 %v472
        %506 = vmatpush.msra.mxu0 %v471
        %507 = vmatmul.f32.gmra.mxu0 %v469
        %v508 = vpop.f32.mrf.mxu0
        %v509 = vadd.f32 %v489, %v508
        %510 = vdwg.mxu0
        %511 = vmatpush.msra.mxu0 %v486
        %512 = vmatpush.msra.mxu0 %v485
        %513 = vmatpush.msra.mxu0 %v484
        %514 = vmatpush.msra.mxu0 %v483
        %515 = vmatpush.msra.mxu0 %v482
        %516 = vmatpush.msra.mxu0 %v481
        %517 = vmatpush.msra.mxu0 %v480
        %518 = vmatpush.msra.mxu0 %v479
        %519 = vmatpush.msra.mxu0 %v478
        %520 = vmatpush.msra.mxu0 %v477
        %521 = vmatpush.msra.mxu0 %v476
        %522 = vmatpush.msra.mxu0 %v475
        %523 = vmatpush.msra.mxu0 %v474
        %524 = vmatpush.msra.mxu0 %v473
        %525 = vmatpush.msra.mxu0 %v472
        %526 = vmatpush.msra.mxu0 %v471
        %527 = vmatmul.f32.gmra.mxu0 %v470
        %v528 = vpop.f32.mrf.mxu0
        %v529 = vadd.f32 %v487, %v528
        %530 = vdwg.mxu0
        %v531 = vld [vmem:[#allocation8] sm:$0x1]
        %v532 = vld [vmem:[%s5] sm:$0x1]
        %533 = vadd.xlane.f32.xlu0 %v509
        %v534 = vpop.xlane.xlu0 %533
        %v535 = vrcp.pop 128.0
        %v536 = vmul.f32 128.0, %v535
        %v537 = vsub.f32 1.0, %v536
        %v538 = vmul.f32 %v535, %v537
        %v539 = vadd.f32 %v535, %v538
        %vm540 = vweird.f32 %v535
        %v541 = vsel %vm540, %v535, %v539
        %v542 = vmul.f32 %v534, %v541
        %v543 = vsub.f32 %v509, %v542
        %v544 = vmul.f32 %v543, %v543
        %545 = vadd.xlane.f32.xlu0 %v544
        %v546 = vpop.xlane.xlu0 %545
        %v547 = vmul.f32 %v546, %v541
        %v548 = vadd.f32 %v547, 1e-05
        %v549 = vrsqrt.pop %v548
        %v550 = vmul.f32 %v549, %v548
        %v551 = vmul.f32 %v550, %v549
        %v552 = vmul.f32 0.5, %v551
        %v553 = vsub.f32 1.5, %v552
        %v554 = vmul.f32 %v549, %v553
        %vm555 = vweird.f32 %v548
        %vm556 = vweird.f32 %v549
        %vm557 = vmor %vm555, %vm556
        %v558 = vsel %vm557, %v549, %v554
        %v559 = vmul.f32 %v543, %v558
        %v561 = vperm.slane %v531, 0
        %v563 = vmul.f32 %v559, %v561
        %v565 = vperm.slane %v532, 0
        %v567 = vadd.f32 %v563, %v565
        %vm568 = vcmask 1040384
        %v569 = vsel %vm568, %v529, 0.0
        %570 = vadd.xlane.f32.xlu0 %v569
        %v571 = vpop.xlane.xlu0 %570
        %v572 = vmul.f32 %v571, %v541
        %v573 = vsub.f32 %v529, %v572
        %v574 = vmul.f32 %v573, %v573
        %v575 = vsel %vm568, %v574, 0.0
        %576 = vadd.xlane.f32.xlu0 %v575
        %v577 = vpop.xlane.xlu0 %576
        %v578 = vmul.f32 %v577, %v541
        %v579 = vadd.f32 %v578, 1e-05
        %v580 = vrsqrt.pop %v579
        %v581 = vmul.f32 %v580, %v579
        %v582 = vmul.f32 %v581, %v580
        %v583 = vmul.f32 0.5, %v582
        %v584 = vsub.f32 1.5, %v583
        %v585 = vmul.f32 %v580, %v584
        %vm586 = vweird.f32 %v579
        %vm587 = vweird.f32 %v580
        %vm588 = vmor %vm586, %vm587
        %v589 = vsel %vm588, %v580, %v585
        %v590 = vmul.f32 %v573, %v589
        %v591 = vmul.f32 %v590, %v531
        %v592 = vadd.f32 %v591, %v532
        %s593 = sadd.s32 %s36, 1
        %p594 = scmp.lt.s32.totalorder %s593, 1
        %s595 = scalar_select %p594, 1, 0
        %s596 = scvt.s32.f32 %s595
        %v597 = vstv %s596
        %v598 = vmul.f32 %v592, %v597
        %v599 = vlaneseq
        %v600 = vshrl.u32 %v599, 7
        %v601 = vrot.slane %v567, 1
        %vm602 = vcmp.eq.s32.totalorder %v600, 7
        %v603 = vsel %vm602, 1, 0
        %vm604 = vcmp.eq.s32.totalorder %v603, 1
        %v605 = vperm.slane %v598, 0
        %v606 = vsel %vm604, %v605, %v601
        %v607 = vld [vmem:[#allocation10] sm:$0xff]
        %v608 = vld [vmem:[#allocation10 + $0x8] sm:$0xff]
        %v609 = vld [vmem:[#allocation10 + $0x10] sm:$0xff]
        %v610 = vld [vmem:[#allocation10 + $0x18] sm:$0xff]
        %v611 = vld [vmem:[#allocation10 + $0x20] sm:$0xff]
        %v612 = vld [vmem:[#allocation10 + $0x28] sm:$0xff]
        %v613 = vld [vmem:[#allocation10 + $0x30] sm:$0xff]
        %v614 = vld [vmem:[#allocation10 + $0x38] sm:$0xff]
        %v615 = vld [vmem:[#allocation10 + $0x40] sm:$0xff]
        %v616 = vld [vmem:[#allocation10 + $0x48] sm:$0xff]
        %v617 = vld [vmem:[#allocation10 + $0x50] sm:$0xff]
        %v618 = vld [vmem:[#allocation10 + $0x58] sm:$0xff]
        %v619 = vld [vmem:[#allocation10 + $0x60] sm:$0xff]
        %v620 = vld [vmem:[#allocation10 + $0x68] sm:$0xff]
        %v621 = vld [vmem:[#allocation10 + $0x70] sm:$0xff]
        %v622 = vld [vmem:[#allocation10 + $0x78] sm:$0xff]
        %v623 = vld [vmem:[#allocation10 + $0x80] sm:$0xff]
        %v624 = vld [vmem:[#allocation10 + $0x88] sm:$0xff]
        %v625 = vld [vmem:[#allocation10 + $0x90] sm:$0xff]
        %v626 = vld [vmem:[#allocation10 + $0x98] sm:$0xff]
        %v627 = vld [vmem:[#allocation10 + $0xa0] sm:$0xff]
        %v628 = vld [vmem:[#allocation10 + $0xa8] sm:$0xff]
        %v629 = vld [vmem:[#allocation10 + $0xb0] sm:$0xff]
        %v630 = vld [vmem:[#allocation10 + $0xb8] sm:$0xff]
        %v631 = vld [vmem:[#allocation10 + $0xc0] sm:$0xff]
        %v632 = vld [vmem:[#allocation10 + $0xc8] sm:$0xff]
        %v633 = vld [vmem:[#allocation10 + $0xd0] sm:$0xff]
        %v634 = vld [vmem:[#allocation10 + $0xd8] sm:$0xff]
        %v635 = vld [vmem:[#allocation10 + $0xe0] sm:$0xff]
        %v636 = vld [vmem:[#allocation10 + $0xe8] sm:$0xff]
        %v637 = vld [vmem:[#allocation10 + $0xf0] sm:$0xff]
        %v638 = vld [vmem:[#allocation10 + $0xf8] sm:$0xff]
        %639 = vmatpush.msra.mxu0 %v637
        %640 = vmatpush.msra.mxu0 %v635
        %641 = vmatpush.msra.mxu0 %v633
        %642 = vmatpush.msra.mxu0 %v631
        %643 = vmatpush.msra.mxu0 %v629
        %644 = vmatpush.msra.mxu0 %v627
        %645 = vmatpush.msra.mxu0 %v625
        %646 = vmatpush.msra.mxu0 %v623
        %647 = vmatpush.msra.mxu0 %v621
        %648 = vmatpush.msra.mxu0 %v619
        %649 = vmatpush.msra.mxu0 %v617
        %650 = vmatpush.msra.mxu0 %v615
        %651 = vmatpush.msra.mxu0 %v613
        %652 = vmatpush.msra.mxu0 %v611
        %653 = vmatpush.msra.mxu0 %v609
        %654 = vmatpush.msra.mxu0 %v607
        %655 = vmatmul.f32.gmra.mxu0 %v567
        %v656 = vpop.f32.mrf.mxu0
        %v657 = vadd.f32 0.0, %v656
        %658 = vdwg.mxu0
        %659 = vmatpush.msra.mxu0 %v638
        %660 = vmatpush.msra.mxu0 %v636
        %661 = vmatpush.msra.mxu0 %v634
        %662 = vmatpush.msra.mxu0 %v632
        %663 = vmatpush.msra.mxu0 %v630
        %664 = vmatpush.msra.mxu0 %v628
        %665 = vmatpush.msra.mxu0 %v626
        %666 = vmatpush.msra.mxu0 %v624
        %667 = vmatpush.msra.mxu0 %v622
        %668 = vmatpush.msra.mxu0 %v620
        %669 = vmatpush.msra.mxu0 %v618
        %670 = vmatpush.msra.mxu0 %v616
        %671 = vmatpush.msra.mxu0 %v614
        %672 = vmatpush.msra.mxu0 %v612
        %673 = vmatpush.msra.mxu0 %v610
        %674 = vmatpush.msra.mxu0 %v608
        %675 = vmatmul.f32.gmra.mxu0 %v567
        %v676 = vpop.f32.mrf.mxu0
        %v677 = vadd.f32 0.0, %v676
        %678 = vdwg.mxu0
        %v679 = vld [vmem:[#allocation11] sm:$0xff]
        %v680 = vld [vmem:[#allocation11 + $0x8] sm:$0xff]
        %v681 = vld [vmem:[#allocation11 + $0x10] sm:$0xff]
        %v682 = vld [vmem:[#allocation11 + $0x18] sm:$0xff]
        %v683 = vld [vmem:[#allocation11 + $0x20] sm:$0xff]
        %v684 = vld [vmem:[#allocation11 + $0x28] sm:$0xff]
        %v685 = vld [vmem:[#allocation11 + $0x30] sm:$0xff]
        %v686 = vld [vmem:[#allocation11 + $0x38] sm:$0xff]
        %v687 = vld [vmem:[#allocation11 + $0x40] sm:$0xff]
        %v688 = vld [vmem:[#allocation11 + $0x48] sm:$0xff]
        %v689 = vld [vmem:[#allocation11 + $0x50] sm:$0xff]
        %v690 = vld [vmem:[#allocation11 + $0x58] sm:$0xff]
        %v691 = vld [vmem:[#allocation11 + $0x60] sm:$0xff]
        %v692 = vld [vmem:[#allocation11 + $0x68] sm:$0xff]
        %v693 = vld [vmem:[#allocation11 + $0x70] sm:$0xff]
        %v694 = vld [vmem:[#allocation11 + $0x78] sm:$0xff]
        %695 = vmatpush.msra.mxu0 %v694
        %696 = vmatpush.msra.mxu0 %v693
        %697 = vmatpush.msra.mxu0 %v692
        %698 = vmatpush.msra.mxu0 %v691
        %699 = vmatpush.msra.mxu0 %v690
        %700 = vmatpush.msra.mxu0 %v689
        %701 = vmatpush.msra.mxu0 %v688
        %702 = vmatpush.msra.mxu0 %v687
        %703 = vmatpush.msra.mxu0 %v686
        %704 = vmatpush.msra.mxu0 %v685
        %705 = vmatpush.msra.mxu0 %v684
        %706 = vmatpush.msra.mxu0 %v683
        %707 = vmatpush.msra.mxu0 %v682
        %708 = vmatpush.msra.mxu0 %v681
        %709 = vmatpush.msra.mxu0 %v680
        %710 = vmatpush.msra.mxu0 %v679
        %711 = vmatmul.f32.gmra.mxu0 %v606
        %v712 = vpop.f32.mrf.mxu0
        %v713 = vadd.f32 0.0, %v712
        %714 = vdwg.mxu0
        %v715 = vadd.f32 %v677, %v713
        %v716 = vld [vmem:[%s8] sm:$0x3]
        %v718 = vperm.slane %v716, 0
        %v719 = vperm.slane %v716, 1
        %v722 = vadd.f32 %v657, %v718
        %v723 = vadd.f32 %v715, %v719
        %vm724 = vcmp.gt.f32.partialorder %v722, 0.0
        %vm725 = vcmp.gt.f32.partialorder %v723, 0.0
        %v726 = vmin.f32 %v722, 0.0
        %v727 = vmin.f32 %v723, 0.0
        %v728 = vmul.f32 %v726, 1.442695
        %v729 = vpow.pop %v728
        %v730 = vmul.f32 %v727, 1.442695
        %v731 = vpow.pop %v730
        %v732 = vsub.f32 %v729, 1.0
        %v733 = vsub.f32 %v731, 1.0
        %v734 = vsel %vm724, %v722, %v732
        %v735 = vsel %vm725, %v723, %v733
        %736 = vst [vmem:[%s468] sm:$0xff] %v734
        %737 = vst [vmem:[%s468 + $0x8] sm:$0xff] %v735
        %s738 = sand.u32 %s256, 1
        %s739 = scalar_lea.sflag [#allocation4], %s738
        %s740 = sand.u32 %s256, 1
        %s741 = smul.addr %s740, 16
        %s742 = scalar_lea.vmem [#allocation13], %s741
        // Predicated region
        $region81: #{tpu_custom_call.1} parent=55 // pred_check
          %p743 = pneg %p266
        $region82: #{tpu_custom_call.1} parent=55 // pred_check_branch
          %745 = sbr.rel (%p743) target = $region84
        $region83: #{tpu_custom_call.1} parent=55 // pred_region
          %747 = vsyncadd %s739, 0
          %s748 = smul.addr %s36, 2
          %s749 = smul.addr %s35, 2
          %s750 = sadd.s32 %s748, %s749
          %s751 = smul.addr %s750, 8
          %s752 = scalar_lea.hbm %s9, %s751
          %s754 = sshll.u32 %s742, 4
          %s755 = int_to_ptr.vmem [resolvable:$true] %s754
          %s756 = sshll.u32 %s752, 4
          %s757 = int_to_ptr.hbm [resolvable:$true] %s756
          %759 = dma.vmem_to_hbm [thread:$0]  %s755, 256, %s757, %s739
        $region84: #{tpu_custom_call.1} parent=55 // pred_fallthru
          _
      $region56: #{tpu_custom_call.1} parent=5 // pred_fallthru
        _
      %p760 = scmp.le.s32.totalorder 2, %s26
      // Predicated region
      $region85: #{tpu_custom_call.1} parent=5 // pred_check
        %p761 = pneg %p760
      $region86: #{tpu_custom_call.1} parent=5 // pred_check_branch
        %763 = sbr.rel (%p761) target = $region88
      $region87: #{tpu_custom_call.1} parent=5 // pred_region
        %s764 = ssub.s32 %s26, 2
        // Predicated region
        $region89: #{tpu_custom_call.1} parent=87 // pred_check
          %p765 = pneg %p272
        $region90: #{tpu_custom_call.1} parent=87 // pred_check_branch
          %767 = sbr.rel (%p765) target = $region92
        $region91: #{tpu_custom_call.1} parent=87 // pred_region
          %s768 = sand.u32 %s257, 1
          %s769 = scalar_lea.sflag [#allocation4], %s768
          %s770 = sand.u32 %s257, 1
          %s771 = smul.addr %s770, 16
          %s772 = scalar_lea.vmem [#allocation13], %s771
          %774 = dma.done %s769, 256
        $region92: #{tpu_custom_call.1} parent=87 // pred_fallthru
          _
      $region88: #{tpu_custom_call.1} parent=5 // pred_fallthru
        _
    $region6: #{tpu_custom_call.1} parent=1 // loop_footer
      %s30 = sadd.s32 1, %s26
    $region7: #{tpu_custom_call.1} parent=1 // loop_footer_branch
      %25 = sbr.rel target = $region3
    $region8: #{tpu_custom_call.1} parent=1 // loop_exit
      _
    %775 = vsyncpa [#allocation3], 1
    %s776 = scalar_lea.sflag [#allocation3], 1
    %777 = vsyncpa %s776, 1
    %778 = vsyncpa [#allocation6], 1
    %s779 = scalar_lea.sflag [#allocation6], 1
    %780 = vsyncpa %s779, 1
    %781 = vsyncpa [#allocation9], 1
    %782 = vsyncpa [#allocation12], 1
    %783 = vsyncpa [#allocation4], 1
    %s784 = scalar_lea.sflag [#allocation4], 1
    %785 = vsyncpa %s784, 1

</llo_original>
